<compile_context>
chip_gen: v7x
topology: tpu7x:2x2x1
jax: 0.10.0
libtpu: 0.0.40
codegen_flags: <defaults>
</compile_context>

<pallas_src>
import jax
import jax.numpy as jnp
from jax.experimental import pallas as pl
from jax.experimental.pallas import tpu as pltpu


def _round_up(v, m):
    return (v + m - 1) // m * m


_VMEM_LIMIT = 48 * 1024 * 1024           # fits v7x's 64 MiB/TC with headroom
_FEAT_RESIDENT_MAX_BYTES = 4 * 1024 * 1024


# ------------------- Pass 1: feat = relu(x @ W_in + b_in) -------------------
def _input_linear_kernel(x_ref, w_ref, b_ref, feat_ref, feat_bf16_ref):
    # bf16 MXU operands, f32 accumulation; bias + ReLU in f32.
    h = jnp.dot(x_ref[...], w_ref[...], preferred_element_type=jnp.float32)
    h = jnp.maximum(h + b_ref[...], 0.0)
    feat_ref[...] = h                              # f32 copy (returned)
    feat_bf16_ref[...] = h.astype(jnp.bfloat16)    # bf16 copy consumed by pass 2


# ------------------- Pass 2: SAGEConv(feat, edge_index) ---------------------
def _sage_kernel_resident(adj_ref, feat_all_ref, inv_deg_ref,
                          w_l_ref, w_r_ref, b_l_ref, out_ref, acc_ref):
    """feat_bf16 is fully VMEM-resident; k-tile and i-tile are sliced in-kernel."""
    i = pl.program_id(0)
    k = pl.program_id(1)
    tm, tk = adj_ref.shape

    @pl.when(k == 0)
    def _():
        acc_ref[...] = jnp.zeros_like(acc_ref)

    # un-normalized neighbor sum:  acc += A[i-tile, k-tile] @ feat[k-tile]  (bf16 -> f32)
    k_off = pl.multiple_of(k * tk, tk)
    feat_k = feat_all_ref[pl.ds(k_off, tk), :]
    acc_ref[...] += jnp.dot(adj_ref[...], feat_k,
                            preferred_element_type=jnp.float32)

    @pl.when(k == pl.num_programs(1) - 1)
    def _():
        # mean aggregation: row-scale by 1/deg (f32), then SAGE epilogue.
        agg = (acc_ref[...] * inv_deg_ref[...]).astype(jnp.bfloat16)
        i_off = pl.multiple_of(i * tm, tm)
        feat_i = feat_all_ref[pl.ds(i_off, tm), :]
        out = jnp.dot(agg, w_l_ref[...], preferred_element_type=jnp.float32)
        out += jnp.dot(feat_i, w_r_ref[...], preferred_element_type=jnp.float32)
        out_ref[...] = (out + b_l_ref[...]).astype(out_ref.dtype)


def _sage_kernel_streamed(adj_ref, feat_k_ref, feat_i_ref, inv_deg_ref,
                          w_l_ref, w_r_ref, b_l_ref, out_ref, acc_ref):
    """feat_bf16 streamed per (i, k) tile (large-graph fallback)."""
    k = pl.program_id(1)

    @pl.when(k == 0)
    def _():
        acc_ref[...] = jnp.zeros_like(acc_ref)

    acc_ref[...] += jnp.dot(adj_ref[...], feat_k_ref[...],
                            preferred_element_type=jnp.float32)

    @pl.when(k == pl.num_programs(1) - 1)
    def _():
        agg = (acc_ref[...] * inv_deg_ref[...]).astype(jnp.bfloat16)
        out = jnp.dot(agg, w_l_ref[...], preferred_element_type=jnp.float32)
        out += jnp.dot(feat_i_ref[...], w_r_ref[...], preferred_element_type=jnp.float32)
        out_ref[...] = (out + b_l_ref[...]).astype(out_ref.dtype)


def vanilla_stellar_encoder(x, edge_index, params, *,
                            feat_resident_max_bytes=_FEAT_RESIDENT_MAX_BYTES):
    """x: [N, input_dim] f32, edge_index: [2, E] int32 (row 0 = src, row 1 = dst).

    Returns (feat [N, hid] f32, out_feat [N, hid] f32).
    """
    n, input_dim = x.shape
    hid = params["w_in"].shape[1]

    # ---- padded / tiled geometry (lane-dense, MXU-friendly) ----
    in_p = _round_up(input_dim, 128)
    hid_p = _round_up(hid, 128)
    if n <= 256:
        # tiny graphs: tm=128 so v7x's two TensorCores can each take an i-tile at n>128
        n_p = _round_up(n, 128)
        tm = 128
        tk = n_p
    else:
        # HBM-bound kernel: big tiles amortize per-grid-step overhead and cut re-streaming
        n_p = _round_up(n, 512)
        tm = 512
        tk = 2048 if n_p % 2048 == 0 else (1024 if n_p % 1024 == 0 else 512)

    # ---- zero-pad inputs / params (padding is exact: padded lanes/rows stay 0) ----
    x_p = jnp.pad(x, ((0, n_p - n), (0, in_p - input_dim))).astype(jnp.bfloat16)
    w_in = jnp.pad(params["w_in"], ((0, in_p - input_dim), (0, hid_p - hid))).astype(jnp.bfloat16)
    b_in = jnp.pad(params["b_in"].reshape(1, -1), ((0, 0), (0, hid_p - hid))).astype(jnp.float32)
    w_l = jnp.pad(params["w_l"], ((0, hid_p - hid), (0, hid_p - hid))).astype(jnp.bfloat16)
    w_r = jnp.pad(params["w_r"], ((0, hid_p - hid), (0, hid_p - hid))).astype(jnp.bfloat16)
    b_l = jnp.pad(params["b_l"].reshape(1, -1), ((0, 0), (0, hid_p - hid))).astype(jnp.float32)

    # ---- mean-aggregation operator (edge counts exact in bf16; 1/deg kept in f32) ----
    # TODO(synk): for large sparse graphs replace this dense O(N^2) adjacency with a CSR
    # scalar-prefetch gather aggregation (row-ptr/col-idx in SMEM + manual make_async_copy),
    # cost O(E*hid); optionally try fp8 adjacency tiles on v7x.
    src, dst = edge_index[0], edge_index[1]
    adj = jnp.zeros((n_p, n_p), jnp.float32).at[dst, src].add(1.0)
    inv_deg = 1.0 / jnp.maximum(jnp.sum(adj, axis=1, keepdims=True), 1.0)
    inv_deg = jnp.broadcast_to(inv_deg, (n_p, hid_p)).astype(jnp.float32)   # lane-dense
    adj_bf16 = adj.astype(jnp.bfloat16)

    # ------------------------------- pass 1 -------------------------------
    feat_p, feat_bf16 = pl.pallas_call(
        _input_linear_kernel,
        out_shape=(jax.ShapeDtypeStruct((n_p, hid_p), jnp.float32),
                   jax.ShapeDtypeStruct((n_p, hid_p), jnp.bfloat16)),
        grid_spec=pltpu.PrefetchScalarGridSpec(
            num_scalar_prefetch=0,
            grid=(n_p // tm,),
            in_specs=[pl.BlockSpec((tm, in_p), lambda i: (i, 0)),
                      pl.BlockSpec((in_p, hid_p), lambda i: (0, 0)),
                      pl.BlockSpec((1, hid_p), lambda i: (0, 0))],
            out_specs=(pl.BlockSpec((tm, hid_p), lambda i: (i, 0)),
                       pl.BlockSpec((tm, hid_p), lambda i: (i, 0)))),
        compiler_params=pltpu.CompilerParams(
            dimension_semantics=("parallel",),
            vmem_limit_bytes=_VMEM_LIMIT),
    )(x_p, w_in, b_in)

    # ------------------------------- pass 2 -------------------------------
    feat_resident = (n_p * hid_p * 2) <= feat_resident_max_bytes
    common_specs = [
        pl.BlockSpec((tm, hid_p), lambda i, k: (i, 0)),       # 1/deg (f32, lane-dense)
        pl.BlockSpec((hid_p, hid_p), lambda i, k: (0, 0)),    # W_l (bf16)
        pl.BlockSpec((hid_p, hid_p), lambda i, k: (0, 0)),    # W_r (bf16)
        pl.BlockSpec((1, hid_p), lambda i, k: (0, 0)),        # b_l (f32)
    ]
    if feat_resident:
        kernel = _sage_kernel_resident
        in_specs = [pl.BlockSpec((tm, tk), lambda i, k: (i, k)),       # adjacency tile
                    pl.BlockSpec((n_p, hid_p), lambda i, k: (0, 0)),   # feat (VMEM-resident)
                    ] + common_specs
        operands = (adj_bf16, feat_bf16, inv_deg, w_l, w_r, b_l)
    else:
        kernel = _sage_kernel_streamed
        in_specs = [pl.BlockSpec((tm, tk), lambda i, k: (i, k)),       # adjacency tile
                    pl.BlockSpec((tk, hid_p), lambda i, k: (k, 0)),    # feat, k-stream
                    pl.BlockSpec((tm, hid_p), lambda i, k: (i, 0)),    # feat, i-tile
                    ] + common_specs
        operands = (adj_bf16, feat_bf16, feat_bf16, inv_deg, w_l, w_r, b_l)

    out_p = pl.pallas_call(
        kernel,
        out_shape=jax.ShapeDtypeStruct((n_p, hid_p), jnp.float32),
        grid_spec=pltpu.PrefetchScalarGridSpec(
            num_scalar_prefetch=0,
            grid=(n_p // tm, n_p // tk),
            in_specs=in_specs,
            out_specs=pl.BlockSpec((tm, hid_p), lambda i, k: (i, 0)),
            scratch_shapes=[pltpu.VMEM((tm, hid_p), jnp.float32)]),
        compiler_params=pltpu.CompilerParams(
            dimension_semantics=("parallel", "arbitrary"),
            vmem_limit_bytes=_VMEM_LIMIT),
    )(*operands)

    return feat_p[:n, :hid], out_p[:n, :hid]


def init_params(key, input_dim, hid_dim):
    k = jax.random.split(key, 5)
    # weights stored as [in, out] (already transposed vs. torch's [out, in])
    return {
        "w_in": jax.random.normal(k[0], (input_dim, hid_dim), jnp.float32) * 0.1,
        "b_in": jax.random.normal(k[1], (hid_dim,), jnp.float32) * 0.1,
        "w_l":  jax.random.normal(k[2], (hid_dim, hid_dim), jnp.float32) * 0.1,
        "b_l":  jax.random.normal(k[3], (hid_dim,), jnp.float32) * 0.1,
        "w_r":  jax.random.normal(k[4], (hid_dim, hid_dim), jnp.float32) * 0.1,
    }


if __name__ == "__main__":
    key = jax.random.PRNGKey(0)
    N, INPUT_DIM, HID_DIM, E = 48, 40, 64, 160

    kx, ke, kp = jax.random.split(key, 3)
    x = jax.random.normal(kx, (N, INPUT_DIM), jnp.float32)
    edge_index = jax.random.randint(ke, (2, E), 0, N, dtype=jnp.int32)
    params = init_params(kp, INPUT_DIM, HID_DIM)

    encoder = jax.jit(vanilla_stellar_encoder,
                      static_argnames=("feat_resident_max_bytes",))

    # default path (feat held VMEM-resident in pass 2)
    feat, out_feat = encoder(x, edge_index, params)
    jax.block_until_ready((feat, out_feat))

    # also exercise the streamed-feat fallback (force by setting the residency cap to 0)
    feat_s, out_feat_s = encoder(x, edge_index, params, feat_resident_max_bytes=0)
    jax.block_until_ready((feat_s, out_feat_s))

    # pure-JAX f32 reference (highest precision)
    hi = jax.lax.Precision.HIGHEST
    ref_feat = jnp.maximum(
        jnp.dot(x, params["w_in"], precision=hi) + params["b_in"][None, :], 0.0)
    adj = jnp.zeros((N, N), jnp.float32).at[edge_index[1], edge_index[0]].add(1.0)
    agg = jnp.dot(adj, ref_feat, precision=hi) / jnp.maximum(
        adj.sum(1, keepdims=True), 1.0)
    ref_out = (jnp.dot(agg, params["w_l"], precision=hi) + params["b_l"][None, :]
               + jnp.dot(ref_feat, params["w_r"], precision=hi))

    # bf16 MXU operands with f32 accumulation -> bf16-level tolerance vs f32 reference
    assert jnp.allclose(feat, ref_feat, atol=2e-2, rtol=2e-2), "feat mismatch"
    assert jnp.allclose(out_feat, ref_out, atol=2e-2, rtol=2e-2), "out_feat mismatch"
    assert jnp.allclose(feat_s, ref_feat, atol=2e-2, rtol=2e-2), "streamed feat mismatch"
    assert jnp.allclose(out_feat_s, ref_out, atol=2e-2, rtol=2e-2), "streamed out_feat mismatch"

    print("KERNEL_OK")
</pallas_src>

<mosaic_0001>
module attributes {stable_mosaic.version = 11 : i64} {
  func.func private @main(%arg0: i32) attributes {dimension_semantics = [#tpu.dimension_semantics<core_parallel>], iteration_bounds = array<i64: 2>, tpu.core_type = #tpu.core_type<sc_scalar_subcore>, window_params = []} {
    return
  }
}

module attributes {stable_mosaic.version = 11 : i64} {
  func.func private @main(%arg0: i32) attributes {dimension_semantics = [#tpu.dimension_semantics<core_parallel>], iteration_bounds = array<i64: 2>, tpu.core_type = #tpu.core_type<sc_scalar_subcore>, window_params = []} {
    return
  }
}

module attributes {stable_mosaic.version = 11 : i64} {
  func.func @_input_linear_kernel(%arg0: i32, %arg1: memref<128x128xbf16, #tpu.memory_space<vmem>>, %arg2: memref<128x128xbf16, #tpu.memory_space<vmem>>, %arg3: memref<1x128xf32, #tpu.memory_space<vmem>>, %arg4: memref<128x128xf32, #tpu.memory_space<vmem>>, %arg5: memref<128x128xbf16, #tpu.memory_space<vmem>>) attributes {dimension_semantics = [#tpu.dimension_semantics<parallel>], iteration_bounds = array<i64: 1>, scalar_prefetch = 0 : i64, scratch_operands = 0 : i64, tpu.core_type = #tpu.core_type<tc>, window_params = [{transform_indices = @transform_0, window_bounds = array<i64: 128, 128>}, {pipeline_mode = #tpu.pipeline_mode<synchronous>, transform_indices = @transform_1, window_bounds = array<i64: 128, 128>}, {pipeline_mode = #tpu.pipeline_mode<synchronous>, transform_indices = @transform_2, window_bounds = array<i64: 1, 128>}, {transform_indices = @transform_3, window_bounds = array<i64: 128, 128>}, {transform_indices = @transform_4, window_bounds = array<i64: 128, 128>}]} {
    %c0 = arith.constant 0 : index
    %c0_0 = arith.constant 0 : index
    %0 = vector.load %arg1[%c0, %c0_0] : memref<128x128xbf16, #tpu.memory_space<vmem>>, vector<128x128xbf16>
    %c0_1 = arith.constant 0 : index
    %c0_2 = arith.constant 0 : index
    %1 = vector.load %arg2[%c0_1, %c0_2] : memref<128x128xbf16, #tpu.memory_space<vmem>>, vector<128x128xbf16>
    %cst = arith.constant dense<0.000000e+00> : vector<128x128xf32>
    %2 = tpu.matmul %0, %1, %cst {dimension_numbers = #tpu.dot_dimension_numbers<[1], [0], [0], [1], [0, 0, 1, 1], [], []>} : vector<128x128xbf16>, vector<128x128xbf16>, vector<128x128xf32> -> vector<128x128xf32>
    %c0_3 = arith.constant 0 : index
    %c0_4 = arith.constant 0 : index
    %3 = vector.load %arg3[%c0_3, %c0_4] : memref<1x128xf32, #tpu.memory_space<vmem>>, vector<1x128xf32>
    %4 = vector.broadcast %3 : vector<1x128xf32> to vector<128x128xf32>
    %5 = arith.addf %2, %4 : vector<128x128xf32>
    %cst_5 = arith.constant 0.000000e+00 : f32
    %6 = vector.broadcast %cst_5 : f32 to vector<128x128xf32>
    %7 = arith.maximumf %5, %6 : vector<128x128xf32>
    %c0_6 = arith.constant 0 : index
    %c0_7 = arith.constant 0 : index
    %8 = vector.load %arg4[%c0_6, %c0_7] : memref<128x128xf32, #tpu.memory_space<vmem>>, vector<128x128xf32>
    tpu.vector_store %arg4[%c0_6, %c0_7], %7 {strides = array<i32>} : memref<128x128xf32, #tpu.memory_space<vmem>>, vector<128x128xf32>,
    %9 = arith.truncf %7 : vector<128x128xf32> to vector<128x128xbf16>
    %c0_8 = arith.constant 0 : index
    %c0_9 = arith.constant 0 : index
    %10 = vector.load %arg5[%c0_8, %c0_9] : memref<128x128xbf16, #tpu.memory_space<vmem>>, vector<128x128xbf16>
    tpu.vector_store %arg5[%c0_8, %c0_9], %9 {strides = array<i32>} : memref<128x128xbf16, #tpu.memory_space<vmem>>, vector<128x128xbf16>,
    return
  }
  func.func @transform_0(%arg0: i32) -> (i32, i32) {
    %c0_i32 = arith.constant 0 : i32
    %c0_i32_0 = arith.constant 0 : i32
    return %arg0, %c0_i32 : i32, i32
  }
  func.func @transform_1(%arg0: i32) -> (i32, i32) {
    %c0_i32 = arith.constant 0 : i32
    %c0_i32_0 = arith.constant 0 : i32
    %c0_i32_1 = arith.constant 0 : i32
    return %c0_i32, %c0_i32_0 : i32, i32
  }
  func.func @transform_2(%arg0: i32) -> (i32, i32) {
    %c0_i32 = arith.constant 0 : i32
    %c0_i32_0 = arith.constant 0 : i32
    %c0_i32_1 = arith.constant 0 : i32
    return %c0_i32, %c0_i32_0 : i32, i32
  }
  func.func @transform_3(%arg0: i32) -> (i32, i32) {
    %c0_i32 = arith.constant 0 : i32
    %c0_i32_0 = arith.constant 0 : i32
    return %arg0, %c0_i32 : i32, i32
  }
  func.func @transform_4(%arg0: i32) -> (i32, i32) {
    %c0_i32 = arith.constant 0 : i32
    %c0_i32_0 = arith.constant 0 : i32
    return %arg0, %c0_i32 : i32, i32
  }
}

module attributes {stable_mosaic.version = 11 : i64} {
  func.func @_sage_kernel_resident(%arg0: i32, %arg1: i32, %arg2: memref<128x128xbf16, #tpu.memory_space<vmem>>, %arg3: memref<128x128xbf16, #tpu.memory_space<vmem>>, %arg4: memref<128x128xf32, #tpu.memory_space<vmem>>, %arg5: memref<128x128xbf16, #tpu.memory_space<vmem>>, %arg6: memref<128x128xbf16, #tpu.memory_space<vmem>>, %arg7: memref<1x128xf32, #tpu.memory_space<vmem>>, %arg8: memref<128x128xf32, #tpu.memory_space<vmem>>, %arg9: memref<128x128xf32, #tpu.memory_space<vmem>>) attributes {dimension_semantics = [#tpu.dimension_semantics<parallel>, #tpu.dimension_semantics<arbitrary>], iteration_bounds = array<i64: 1, 1>, scalar_prefetch = 0 : i64, scratch_operands = 1 : i64, tpu.core_type = #tpu.core_type<tc>, window_params = [{transform_indices = @transform_0, window_bounds = array<i64: 128, 128>}, {pipeline_mode = #tpu.pipeline_mode<synchronous>, transform_indices = @transform_1, window_bounds = array<i64: 128, 128>}, {transform_indices = @transform_2, window_bounds = array<i64: 128, 128>}, {pipeline_mode = #tpu.pipeline_mode<synchronous>, transform_indices = @transform_3, window_bounds = array<i64: 128, 128>}, {pipeline_mode = #tpu.pipeline_mode<synchronous>, transform_indices = @transform_4, window_bounds = array<i64: 128, 128>}, {pipeline_mode = #tpu.pipeline_mode<synchronous>, transform_indices = @transform_5, window_bounds = array<i64: 1, 128>}, {transform_indices = @transform_6, window_bounds = array<i64: 128, 128>}]} {
    %c0_i32 = arith.constant 0 : i32
    %0 = arith.cmpi eq, %arg1, %c0_i32 : i32
    %1 = arith.extui %0 : i1 to i32
    %c0_i32_0 = arith.constant 0 : i32
    %2 = arith.cmpi ne, %1, %c0_i32_0 : i32
    scf.if %2 {
      %cst_9 = arith.constant 0.000000e+00 : f32
      %15 = vector.broadcast %cst_9 : f32 to vector<128x128xf32>
      %c0_10 = arith.constant 0 : index
      %c0_11 = arith.constant 0 : index
      %16 = vector.load %arg9[%c0_10, %c0_11] : memref<128x128xf32, #tpu.memory_space<vmem>>, vector<128x128xf32>
      tpu.vector_store %arg9[%c0_10, %c0_11], %15 {strides = array<i32>} : memref<128x128xf32, #tpu.memory_space<vmem>>, vector<128x128xf32>,
    } else {
    }
    %c128_i32 = arith.constant 128 : i32
    %3 = arith.muli %arg1, %c128_i32 : i32
    %4 = tpu.assume_multiple %3, 128 : i32
    %5 = arith.index_cast %4 : i32 to index
    %c0 = arith.constant 0 : index
    %6 = vector.load %arg3[%5, %c0] : memref<128x128xbf16, #tpu.memory_space<vmem>>, vector<128x128xbf16>
    %c0_1 = arith.constant 0 : index
    %c0_2 = arith.constant 0 : index
    %7 = vector.load %arg9[%c0_1, %c0_2] : memref<128x128xf32, #tpu.memory_space<vmem>>, vector<128x128xf32>
    %c0_3 = arith.constant 0 : index
    %c0_4 = arith.constant 0 : index
    %8 = vector.load %arg2[%c0_3, %c0_4] : memref<128x128xbf16, #tpu.memory_space<vmem>>, vector<128x128xbf16>
    %cst = arith.constant dense<0.000000e+00> : vector<128x128xf32>
    %9 = tpu.matmul %8, %6, %cst {dimension_numbers = #tpu.dot_dimension_numbers<[1], [0], [0], [1], [0, 0, 1, 1], [], []>} : vector<128x128xbf16>, vector<128x128xbf16>, vector<128x128xf32> -> vector<128x128xf32>
    %10 = arith.addf %7, %9 : vector<128x128xf32>
    %c0_5 = arith.constant 0 : index
    %c0_6 = arith.constant 0 : index
    %11 = vector.load %arg9[%c0_5, %c0_6] : memref<128x128xf32, #tpu.memory_space<vmem>>, vector<128x128xf32>
    tpu.vector_store %arg9[%c0_5, %c0_6], %10 {strides = array<i32>} : memref<128x128xf32, #tpu.memory_space<vmem>>, vector<128x128xf32>,
    %c0_i32_7 = arith.constant 0 : i32
    %12 = arith.cmpi eq, %arg1, %c0_i32_7 : i32
    %13 = arith.extui %12 : i1 to i32
    %c0_i32_8 = arith.constant 0 : i32
    %14 = arith.cmpi ne, %13, %c0_i32_8 : i32
    scf.if %14 {
      %c0_9 = arith.constant 0 : index
      %c0_10 = arith.constant 0 : index
      %15 = vector.load %arg9[%c0_9, %c0_10] : memref<128x128xf32, #tpu.memory_space<vmem>>, vector<128x128xf32>
      %c0_11 = arith.constant 0 : index
      %c0_12 = arith.constant 0 : index
      %16 = vector.load %arg4[%c0_11, %c0_12] : memref<128x128xf32, #tpu.memory_space<vmem>>, vector<128x128xf32>
      %17 = arith.mulf %15, %16 : vector<128x128xf32>
      %18 = arith.truncf %17 : vector<128x128xf32> to vector<128x128xbf16>
      %c128_i32_13 = arith.constant 128 : i32
      %19 = arith.muli %arg0, %c128_i32_13 : i32
      %20 = tpu.assume_multiple %19, 128 : i32
      %21 = arith.index_cast %20 : i32 to index
      %c0_14 = arith.constant 0 : index
      %22 = vector.load %arg3[%21, %c0_14] : memref<128x128xbf16, #tpu.memory_space<vmem>>, vector<128x128xbf16>
      %c0_15 = arith.constant 0 : index
      %c0_16 = arith.constant 0 : index
      %23 = vector.load %arg5[%c0_15, %c0_16] : memref<128x128xbf16, #tpu.memory_space<vmem>>, vector<128x128xbf16>
      %cst_17 = arith.constant dense<0.000000e+00> : vector<128x128xf32>
      %24 = tpu.matmul %18, %23, %cst_17 {dimension_numbers = #tpu.dot_dimension_numbers<[1], [0], [0], [1], [0, 0, 1, 1], [], []>} : vector<128x128xbf16>, vector<128x128xbf16>, vector<128x128xf32> -> vector<128x128xf32>
      %c0_18 = arith.constant 0 : index
      %c0_19 = arith.constant 0 : index
      %25 = vector.load %arg6[%c0_18, %c0_19] : memref<128x128xbf16, #tpu.memory_space<vmem>>, vector<128x128xbf16>
      %cst_20 = arith.constant dense<0.000000e+00> : vector<128x128xf32>
      %26 = tpu.matmul %22, %25, %cst_20 {dimension_numbers = #tpu.dot_dimension_numbers<[1], [0], [0], [1], [0, 0, 1, 1], [], []>} : vector<128x128xbf16>, vector<128x128xbf16>, vector<128x128xf32> -> vector<128x128xf32>
      %27 = arith.addf %24, %26 : vector<128x128xf32>
      %c0_21 = arith.constant 0 : index
      %c0_22 = arith.constant 0 : index
      %28 = vector.load %arg7[%c0_21, %c0_22] : memref<1x128xf32, #tpu.memory_space<vmem>>, vector<1x128xf32>
      %29 = vector.broadcast %28 : vector<1x128xf32> to vector<128x128xf32>
      %30 = arith.addf %27, %29 : vector<128x128xf32>
      %c0_23 = arith.constant 0 : index
      %c0_24 = arith.constant 0 : index
      %31 = vector.load %arg8[%c0_23, %c0_24] : memref<128x128xf32, #tpu.memory_space<vmem>>, vector<128x128xf32>
      tpu.vector_store %arg8[%c0_23, %c0_24], %30 {strides = array<i32>} : memref<128x128xf32, #tpu.memory_space<vmem>>, vector<128x128xf32>,
    } else {
    }
    return
  }
  func.func @transform_0(%arg0: i32, %arg1: i32) -> (i32, i32) {
    %c0_i32 = arith.constant 0 : i32
    return %arg0, %arg1 : i32, i32
  }
  func.func @transform_1(%arg0: i32, %arg1: i32) -> (i32, i32) {
    %c0_i32 = arith.constant 0 : i32
    %c0_i32_0 = arith.constant 0 : i32
    %c0_i32_1 = arith.constant 0 : i32
    return %c0_i32, %c0_i32_0 : i32, i32
  }
  func.func @transform_2(%arg0: i32, %arg1: i32) -> (i32, i32) {
    %c0_i32 = arith.constant 0 : i32
    %c0_i32_0 = arith.constant 0 : i32
    return %arg0, %c0_i32 : i32, i32
  }
  func.func @transform_3(%arg0: i32, %arg1: i32) -> (i32, i32) {
    %c0_i32 = arith.constant 0 : i32
    %c0_i32_0 = arith.constant 0 : i32
    %c0_i32_1 = arith.constant 0 : i32
    return %c0_i32, %c0_i32_0 : i32, i32
  }
  func.func @transform_4(%arg0: i32, %arg1: i32) -> (i32, i32) {
    %c0_i32 = arith.constant 0 : i32
    %c0_i32_0 = arith.constant 0 : i32
    %c0_i32_1 = arith.constant 0 : i32
    return %c0_i32, %c0_i32_0 : i32, i32
  }
  func.func @transform_5(%arg0: i32, %arg1: i32) -> (i32, i32) {
    %c0_i32 = arith.constant 0 : i32
    %c0_i32_0 = arith.constant 0 : i32
    %c0_i32_1 = arith.constant 0 : i32
    return %c0_i32, %c0_i32_0 : i32, i32
  }
  func.func @transform_6(%arg0: i32, %arg1: i32) -> (i32, i32) {
    %c0_i32 = arith.constant 0 : i32
    %c0_i32_0 = arith.constant 0 : i32
    return %arg0, %c0_i32 : i32, i32
  }
}

</mosaic_0001>

<llo_original>
// kernel: vanilla_stellar_encoder.2
$region0: #{vanilla_stellar_encoder.2}
  #allocation0 [shape = 'u32[]', space=smem, size = 0x4, offset = 0x4, fixed_abs, tag = 'smem constant byte address 0x4 - core index']
  #allocation1 [shape = 'u32[144,128]{1,0:T(1,128)}', space=vmem, size = 0x12000, scoped, tag = 'internal scratch']
  %s0 = inlined_call_operand.vmem [shape: bf16[128,128], index: 0, kind: input, shape index: {}]
  %s1 = inlined_call_operand.vmem [shape: bf16[128,128], index: 1, kind: input, shape index: {}]
  %s2 = inlined_call_operand.vmem [shape: f32[1,128], index: 2, kind: input, shape index: {}]
  %s3 = inlined_call_operand.vmem [shape: f32[128,128], index: 3, kind: output, shape index: {0}]
  %s4 = inlined_call_operand.vmem [shape: bf16[128,128], index: 4, kind: output, shape index: {1}]
  %5 = xla_tuple %s3, %s4
  %s6 = sld [smem:[#allocation0]]
  $region30: #{vanilla_stellar_encoder.2} parent=0
    _
  %s8 = ssub.s32 1, %s6
  %s9 = scalar_select 0, %s8, %s6
  // Predicated region
  $region2: #{vanilla_stellar_encoder.2} parent=0 // pred_check
    _
  $region3: #{vanilla_stellar_encoder.2} parent=0 // pred_check_branch
    %11 = sbr.rel (0) target = $region5
  $region4: #{vanilla_stellar_encoder.2} parent=0 // pred_region
    _
  $region5: #{vanilla_stellar_encoder.2} parent=0 // pred_fallthru
    _
  // Predicated region
  $region6: #{vanilla_stellar_encoder.2} parent=0 // pred_check
    _
  $region7: #{vanilla_stellar_encoder.2} parent=0 // pred_check_branch
    %13 = sbr.rel (0) target = $region9
  $region8: #{vanilla_stellar_encoder.2} parent=0 // pred_region
    _
  $region9: #{vanilla_stellar_encoder.2} parent=0 // pred_fallthru
    _
  // Predicated region
  $region10: #{vanilla_stellar_encoder.2} parent=0 // pred_check
    _
  $region11: #{vanilla_stellar_encoder.2} parent=0 // pred_check_branch
    %15 = sbr.rel (0) target = $region13
  $region12: #{vanilla_stellar_encoder.2} parent=0 // pred_region
    _
  $region13: #{vanilla_stellar_encoder.2} parent=0 // pred_fallthru
    _
  %v17 = vld [vmem:[%s0] sm:$0xf]
  %v18 = vld [vmem:[%s0 + $0x4] sm:$0xf]
  %v19 = vld [vmem:[%s0 + $0x8] sm:$0xf]
  %v20 = vld [vmem:[%s0 + $0xc] sm:$0xf]
  %v21 = vld [vmem:[%s0 + $0x10] sm:$0xf]
  %v22 = vld [vmem:[%s0 + $0x14] sm:$0xf]
  %v23 = vld [vmem:[%s0 + $0x18] sm:$0xf]
  %v24 = vld [vmem:[%s0 + $0x1c] sm:$0xf]
  %v25 = vld [vmem:[%s0 + $0x20] sm:$0xf]
  %v26 = vld [vmem:[%s0 + $0x24] sm:$0xf]
  %v27 = vld [vmem:[%s0 + $0x28] sm:$0xf]
  %v28 = vld [vmem:[%s0 + $0x2c] sm:$0xf]
  %v29 = vld [vmem:[%s0 + $0x30] sm:$0xf]
  %v30 = vld [vmem:[%s0 + $0x34] sm:$0xf]
  %v31 = vld [vmem:[%s0 + $0x38] sm:$0xf]
  %v32 = vld [vmem:[%s0 + $0x3c] sm:$0xf]
  %v33 = vld [vmem:[%s1] sm:$0xf]
  %v34 = vld [vmem:[%s1 + $0x4] sm:$0xf]
  %v35 = vld [vmem:[%s1 + $0x8] sm:$0xf]
  %v36 = vld [vmem:[%s1 + $0xc] sm:$0xf]
  %v37 = vld [vmem:[%s1 + $0x10] sm:$0xf]
  %v38 = vld [vmem:[%s1 + $0x14] sm:$0xf]
  %v39 = vld [vmem:[%s1 + $0x18] sm:$0xf]
  %v40 = vld [vmem:[%s1 + $0x1c] sm:$0xf]
  %v41 = vld [vmem:[%s1 + $0x20] sm:$0xf]
  %v42 = vld [vmem:[%s1 + $0x24] sm:$0xf]
  %v43 = vld [vmem:[%s1 + $0x28] sm:$0xf]
  %v44 = vld [vmem:[%s1 + $0x2c] sm:$0xf]
  %v45 = vld [vmem:[%s1 + $0x30] sm:$0xf]
  %v46 = vld [vmem:[%s1 + $0x34] sm:$0xf]
  %v47 = vld [vmem:[%s1 + $0x38] sm:$0xf]
  %v48 = vld [vmem:[%s1 + $0x3c] sm:$0xf]
  %v49 = vld [vmem:[%s2] sm:$0x1]
  %v51 = vlaneseq
  %v52 = vshrl.u32 %v51, 7
  %v53 = vsub.s32 0, %v52
  %v54 = vrot.slane %v49, %v53
  %v72 = vunpack.c.l.b16 %v17
  %v73 = vunpack.c.l.b16 %v18
  %v74 = vunpack.c.l.b16 %v19
  %v75 = vunpack.c.l.b16 %v20
  %v76 = vunpack.c.l.b16 %v21
  %v77 = vunpack.c.l.b16 %v22
  %v78 = vunpack.c.l.b16 %v23
  %v79 = vunpack.c.l.b16 %v24
  %v80 = vunpack.c.l.b16 %v25
  %v81 = vunpack.c.l.b16 %v26
  %v82 = vunpack.c.l.b16 %v27
  %v83 = vunpack.c.l.b16 %v28
  %v84 = vunpack.c.l.b16 %v29
  %v85 = vunpack.c.l.b16 %v30
  %v86 = vunpack.c.l.b16 %v31
  %v87 = vunpack.c.l.b16 %v32
  %v88 = vpack.c.b16 %v73, %v72
  %v89 = vpack.c.b16 %v75, %v74
  %v90 = vpack.c.b16 %v77, %v76
  %v91 = vpack.c.b16 %v79, %v78
  %v92 = vpack.c.b16 %v81, %v80
  %v93 = vpack.c.b16 %v83, %v82
  %v94 = vpack.c.b16 %v85, %v84
  %v95 = vpack.c.b16 %v87, %v86
  %v120 = vunpack.c.l.b16 %v33
  %v121 = vunpack.c.l.b16 %v34
  %v122 = vunpack.c.l.b16 %v35
  %v123 = vunpack.c.l.b16 %v36
  %v124 = vunpack.c.l.b16 %v37
  %v125 = vunpack.c.l.b16 %v38
  %v126 = vunpack.c.l.b16 %v39
  %v127 = vunpack.c.l.b16 %v40
  %v128 = vunpack.c.l.b16 %v41
  %v129 = vunpack.c.l.b16 %v42
  %v130 = vunpack.c.l.b16 %v43
  %v131 = vunpack.c.l.b16 %v44
  %v132 = vunpack.c.l.b16 %v45
  %v133 = vunpack.c.l.b16 %v46
  %v134 = vunpack.c.l.b16 %v47
  %v135 = vunpack.c.l.b16 %v48
  %v136 = vpack.c.b16 %v121, %v120
  %v137 = vpack.c.b16 %v123, %v122
  %v138 = vpack.c.b16 %v125, %v124
  %v139 = vpack.c.b16 %v127, %v126
  %v140 = vpack.c.b16 %v129, %v128
  %v141 = vpack.c.b16 %v131, %v130
  %v142 = vpack.c.b16 %v133, %v132
  %v143 = vpack.c.b16 %v135, %v134
  %152 = vmatprep.subr.bf16.mxu0 0
  %153 = vmatpush1.bf16.msra.mxu0 %v136
  %154 = vmatprep.subr.bf16.mxu0 0
  %155 = vmatpush1.bf16.msra.mxu0 %v137
  %156 = vmatprep.subr.bf16.mxu0 0
  %157 = vmatpush1.bf16.msra.mxu0 %v138
  %158 = vmatprep.subr.bf16.mxu0 0
  %159 = vmatpush1.bf16.msra.mxu0 %v139
  %160 = vmatprep.subr.bf16.mxu0 0
  %161 = vmatpush1.bf16.msra.mxu0 %v140
  %162 = vmatprep.subr.bf16.mxu0 0
  %163 = vmatpush1.bf16.msra.mxu0 %v141
  %164 = vmatprep.subr.bf16.mxu0 0
  %165 = vmatpush1.bf16.msra.mxu0 %v142
  %166 = vmatprep.subr.bf16.mxu0 0
  %167 = vmatpush1.bf16.msra.mxu0 %v143
  %168 = vmatprep.subr.bf16.mxu0 0
  %169 = vmatpush1.bf16.msra.mxu0 0
  %170 = vmatprep.subr.bf16.mxu0 0
  %171 = vmatpush1.bf16.msra.mxu0 0
  %172 = vmatprep.subr.bf16.mxu0 0
  %173 = vmatpush1.bf16.msra.mxu0 0
  %174 = vmatprep.subr.bf16.mxu0 0
  %175 = vmatpush1.bf16.msra.mxu0 0
  %176 = vmatprep.subr.bf16.mxu0 0
  %177 = vmatpush1.bf16.msra.mxu0 0
  %178 = vmatprep.subr.bf16.mxu0 0
  %179 = vmatpush1.bf16.msra.mxu0 0
  %180 = vmatprep.subr.bf16.mxu0 0
  %181 = vmatpush1.bf16.msra.mxu0 0
  %182 = vmatprep.subr.bf16.mxu0 0
  %183 = vmatpush1.bf16.msra.mxu0 0
  %184 = vmatprep.mubr.bf16.mxu0 0
  %185 = vmatmul.mubr.bf16.gmra.mrb[0].mxu0 %v88
  %v186 = vpop.f32.mrb[0].mxu0
  %v187 = vadd.f32 %v54, %v186
  %v188 = vpop.f32.mrb[0].mxu0
  %v189 = vpop.f32.mrb[0].mxu0
  %v190 = vadd.f32 %v54, %v189
  %v191 = vpop.f32.mrb[0].mxu0
  %192 = vmatprep.mubr.bf16.mxu0 0
  %193 = vmatmul.mubr.bf16.gmra.mrb[0].mxu0 %v89
  %v194 = vpop.f32.mrb[0].mxu0
  %v195 = vadd.f32 %v54, %v194
  %v196 = vpop.f32.mrb[0].mxu0
  %v197 = vpop.f32.mrb[0].mxu0
  %v198 = vadd.f32 %v54, %v197
  %v199 = vpop.f32.mrb[0].mxu0
  %200 = vmatprep.mubr.bf16.mxu0 0
  %201 = vmatmul.mubr.bf16.gmra.mrb[0].mxu0 %v90
  %v202 = vpop.f32.mrb[0].mxu0
  %v203 = vadd.f32 %v54, %v202
  %v204 = vpop.f32.mrb[0].mxu0
  %v205 = vpop.f32.mrb[0].mxu0
  %v206 = vadd.f32 %v54, %v205
  %v207 = vpop.f32.mrb[0].mxu0
  %208 = vmatprep.mubr.bf16.mxu0 0
  %209 = vmatmul.mubr.bf16.gmra.mrb[0].mxu0 %v91
  %v210 = vpop.f32.mrb[0].mxu0
  %v211 = vadd.f32 %v54, %v210
  %v212 = vpop.f32.mrb[0].mxu0
  %v213 = vpop.f32.mrb[0].mxu0
  %v214 = vadd.f32 %v54, %v213
  %v215 = vpop.f32.mrb[0].mxu0
  %216 = vmatprep.mubr.bf16.mxu0 0
  %217 = vmatmul.mubr.bf16.gmra.mrb[0].mxu0 %v92
  %v218 = vpop.f32.mrb[0].mxu0
  %v219 = vadd.f32 %v54, %v218
  %v220 = vpop.f32.mrb[0].mxu0
  %v221 = vpop.f32.mrb[0].mxu0
  %v222 = vadd.f32 %v54, %v221
  %v223 = vpop.f32.mrb[0].mxu0
  %224 = vmatprep.mubr.bf16.mxu0 0
  %225 = vmatmul.mubr.bf16.gmra.mrb[0].mxu0 %v93
  %v226 = vpop.f32.mrb[0].mxu0
  %v227 = vadd.f32 %v54, %v226
  %v228 = vpop.f32.mrb[0].mxu0
  %v229 = vpop.f32.mrb[0].mxu0
  %v230 = vadd.f32 %v54, %v229
  %v231 = vpop.f32.mrb[0].mxu0
  %232 = vmatprep.mubr.bf16.mxu0 0
  %233 = vmatmul.mubr.bf16.gmra.mrb[0].mxu0 %v94
  %v234 = vpop.f32.mrb[0].mxu0
  %v235 = vadd.f32 %v54, %v234
  %v236 = vpop.f32.mrb[0].mxu0
  %v237 = vpop.f32.mrb[0].mxu0
  %v238 = vadd.f32 %v54, %v237
  %v239 = vpop.f32.mrb[0].mxu0
  %240 = vmatprep.mubr.bf16.mxu0 0
  %241 = vmatmul.mubr.bf16.gmra.mrb[0].mxu0 %v95
  %v242 = vpop.f32.mrb[0].mxu0
  %v243 = vadd.f32 %v54, %v242
  %v244 = vpop.f32.mrb[0].mxu0
  %v245 = vpop.f32.mrb[0].mxu0
  %v246 = vadd.f32 %v54, %v245
  %v247 = vpop.f32.mrb[0].mxu0
  %248 = vdwg.mxu0
  %v249 = vmax.f32 %v187, 0.0
  %v250 = vmax.f32 %v190, 0.0
  %v251 = vmax.f32 %v195, 0.0
  %v252 = vmax.f32 %v198, 0.0
  %v253 = vmax.f32 %v203, 0.0
  %v254 = vmax.f32 %v206, 0.0
  %v255 = vmax.f32 %v211, 0.0
  %v256 = vmax.f32 %v214, 0.0
  %v257 = vmax.f32 %v219, 0.0
  %v258 = vmax.f32 %v222, 0.0
  %v259 = vmax.f32 %v227, 0.0
  %v260 = vmax.f32 %v230, 0.0
  %v261 = vmax.f32 %v235, 0.0
  %v262 = vmax.f32 %v238, 0.0
  %v263 = vmax.f32 %v243, 0.0
  %v264 = vmax.f32 %v246, 0.0
  %265 = vst [vmem:[%s3] sm:$0xff] %v249
  %266 = vst [vmem:[%s3 + $0x8] sm:$0xff] %v250
  %267 = vst [vmem:[%s3 + $0x10] sm:$0xff] %v251
  %268 = vst [vmem:[%s3 + $0x18] sm:$0xff] %v252
  %269 = vst [vmem:[%s3 + $0x20] sm:$0xff] %v253
  %270 = vst [vmem:[%s3 + $0x28] sm:$0xff] %v254
  %271 = vst [vmem:[%s3 + $0x30] sm:$0xff] %v255
  %272 = vst [vmem:[%s3 + $0x38] sm:$0xff] %v256
  %273 = vst [vmem:[%s3 + $0x40] sm:$0xff] %v257
  %274 = vst [vmem:[%s3 + $0x48] sm:$0xff] %v258
  %275 = vst [vmem:[%s3 + $0x50] sm:$0xff] %v259
  %276 = vst [vmem:[%s3 + $0x58] sm:$0xff] %v260
  %277 = vst [vmem:[%s3 + $0x60] sm:$0xff] %v261
  %278 = vst [vmem:[%s3 + $0x68] sm:$0xff] %v262
  %279 = vst [vmem:[%s3 + $0x70] sm:$0xff] %v263
  %280 = vst [vmem:[%s3 + $0x78] sm:$0xff] %v264
  %v281 = vpack.c.bf16 %v250, %v249
  %v282 = vpack.c.bf16 %v252, %v251
  %v283 = vpack.c.bf16 %v254, %v253
  %v284 = vpack.c.bf16 %v256, %v255
  %v285 = vpack.c.bf16 %v258, %v257
  %v286 = vpack.c.bf16 %v260, %v259
  %v287 = vpack.c.bf16 %v262, %v261
  %v288 = vpack.c.bf16 %v264, %v263
  %v297 = vunpack.c.l.b16 %v281
  %v298 = vunpack.c.h.b16 %v281
  %v299 = vunpack.c.l.b16 %v282
  %v300 = vunpack.c.h.b16 %v282
  %v301 = vunpack.c.l.b16 %v283
  %v302 = vunpack.c.h.b16 %v283
  %v303 = vunpack.c.l.b16 %v284
  %v304 = vunpack.c.h.b16 %v284
  %v305 = vunpack.c.l.b16 %v285
  %v306 = vunpack.c.h.b16 %v285
  %v307 = vunpack.c.l.b16 %v286
  %v308 = vunpack.c.h.b16 %v286
  %v309 = vunpack.c.l.b16 %v287
  %v310 = vunpack.c.h.b16 %v287
  %v311 = vunpack.c.l.b16 %v288
  %v312 = vunpack.c.h.b16 %v288
  %v313 = vpack.c.b16 %v297, %v297
  %v314 = vpack.c.b16 %v298, %v298
  %v315 = vpack.c.b16 %v299, %v299
  %v316 = vpack.c.b16 %v300, %v300
  %v317 = vpack.c.b16 %v301, %v301
  %v318 = vpack.c.b16 %v302, %v302
  %v319 = vpack.c.b16 %v303, %v303
  %v320 = vpack.c.b16 %v304, %v304
  %v321 = vpack.c.b16 %v305, %v305
  %v322 = vpack.c.b16 %v306, %v306
  %v323 = vpack.c.b16 %v307, %v307
  %v324 = vpack.c.b16 %v308, %v308
  %v325 = vpack.c.b16 %v309, %v309
  %v326 = vpack.c.b16 %v310, %v310
  %v327 = vpack.c.b16 %v311, %v311
  %v328 = vpack.c.b16 %v312, %v312
  %345 = vst [vmem:[%s4] sm:$0xf] %v313
  %346 = vst [vmem:[%s4 + $0x4] sm:$0xf] %v314
  %347 = vst [vmem:[%s4 + $0x8] sm:$0xf] %v315
  %348 = vst [vmem:[%s4 + $0xc] sm:$0xf] %v316
  %349 = vst [vmem:[%s4 + $0x10] sm:$0xf] %v317
  %350 = vst [vmem:[%s4 + $0x14] sm:$0xf] %v318
  %351 = vst [vmem:[%s4 + $0x18] sm:$0xf] %v319
  %352 = vst [vmem:[%s4 + $0x1c] sm:$0xf] %v320
  %353 = vst [vmem:[%s4 + $0x20] sm:$0xf] %v321
  %354 = vst [vmem:[%s4 + $0x24] sm:$0xf] %v322
  %355 = vst [vmem:[%s4 + $0x28] sm:$0xf] %v323
  %356 = vst [vmem:[%s4 + $0x2c] sm:$0xf] %v324
  %357 = vst [vmem:[%s4 + $0x30] sm:$0xf] %v325
  %358 = vst [vmem:[%s4 + $0x34] sm:$0xf] %v326
  %359 = vst [vmem:[%s4 + $0x38] sm:$0xf] %v327
  %360 = vst [vmem:[%s4 + $0x3c] sm:$0xf] %v328
  // Predicated region
  $region14: #{vanilla_stellar_encoder.2} parent=0 // pred_check
    _
  $region15: #{vanilla_stellar_encoder.2} parent=0 // pred_check_branch
    %362 = sbr.rel (0) target = $region17
  $region16: #{vanilla_stellar_encoder.2} parent=0 // pred_region
    _
  $region17: #{vanilla_stellar_encoder.2} parent=0 // pred_fallthru
    _
  // Predicated region
  $region18: #{vanilla_stellar_encoder.2} parent=0 // pred_check
    _
  $region19: #{vanilla_stellar_encoder.2} parent=0 // pred_check_branch
    %364 = sbr.rel (0) target = $region21
  $region20: #{vanilla_stellar_encoder.2} parent=0 // pred_region
    _
  $region21: #{vanilla_stellar_encoder.2} parent=0 // pred_fallthru
    _
  // Predicated region
  $region22: #{vanilla_stellar_encoder.2} parent=0 // pred_check
    _
  $region23: #{vanilla_stellar_encoder.2} parent=0 // pred_check_branch
    %366 = sbr.rel (0) target = $region25
  $region24: #{vanilla_stellar_encoder.2} parent=0 // pred_region
    _
  $region25: #{vanilla_stellar_encoder.2} parent=0 // pred_fallthru
    _
  // Predicated region
  $region26: #{vanilla_stellar_encoder.2} parent=0 // pred_check
    _
  $region27: #{vanilla_stellar_encoder.2} parent=0 // pred_check_branch
    %368 = sbr.rel (0) target = $region29
  $region28: #{vanilla_stellar_encoder.2} parent=0 // pred_region
    _
  $region29: #{vanilla_stellar_encoder.2} parent=0 // pred_fallthru
    _

// kernel: vanilla_stellar_encoder.3
$region0: #{vanilla_stellar_encoder.3}
  #allocation0 [shape = 'u32[]', space=smem, size = 0x4, offset = 0x4, fixed_abs, tag = 'smem constant byte address 0x4 - core index']
  #allocation1 [shape = 'u32[144,128]{1,0:T(1,128)}', space=vmem, size = 0x12000, scoped, tag = 'internal scratch']
  #allocation2 [shape = 'f32[128,128]{1,0:T(8,128)}', space=vmem, size = 0x10000, scoped, tag = 'scratch operand']
  %s0 = inlined_call_operand.vmem [shape: bf16[128,128], index: 0, kind: input, shape index: {}]
  %s1 = inlined_call_operand.vmem [shape: bf16[128,128], index: 1, kind: input, shape index: {}]
  %s2 = inlined_call_operand.vmem [shape: f32[128,128], index: 2, kind: input, shape index: {}]
  %s3 = inlined_call_operand.vmem [shape: bf16[128,128], index: 3, kind: input, shape index: {}]
  %s4 = inlined_call_operand.vmem [shape: bf16[128,128], index: 4, kind: input, shape index: {}]
  %s5 = inlined_call_operand.vmem [shape: f32[1,128], index: 5, kind: input, shape index: {}]
  %s6 = inlined_call_operand.vmem [shape: f32[128,128], index: 6, kind: output, shape index: {}]
  %s7 = sld [smem:[#allocation0]]
  $region42: #{vanilla_stellar_encoder.3} parent=0
    _
  %s9 = ssub.s32 1, %s7
  %s10 = scalar_select 0, %s9, %s7
  // Predicated region
  $region2: #{vanilla_stellar_encoder.3} parent=0 // pred_check
    _
  $region3: #{vanilla_stellar_encoder.3} parent=0 // pred_check_branch
    %12 = sbr.rel (0) target = $region5
  $region4: #{vanilla_stellar_encoder.3} parent=0 // pred_region
    _
  $region5: #{vanilla_stellar_encoder.3} parent=0 // pred_fallthru
    _
  // Predicated region
  $region6: #{vanilla_stellar_encoder.3} parent=0 // pred_check
    _
  $region7: #{vanilla_stellar_encoder.3} parent=0 // pred_check_branch
    %14 = sbr.rel (0) target = $region9
  $region8: #{vanilla_stellar_encoder.3} parent=0 // pred_region
    _
  $region9: #{vanilla_stellar_encoder.3} parent=0 // pred_fallthru
    _
  // Predicated region
  $region10: #{vanilla_stellar_encoder.3} parent=0 // pred_check
    _
  $region11: #{vanilla_stellar_encoder.3} parent=0 // pred_check_branch
    %16 = sbr.rel (0) target = $region13
  $region12: #{vanilla_stellar_encoder.3} parent=0 // pred_region
    _
  $region13: #{vanilla_stellar_encoder.3} parent=0 // pred_fallthru
    _
  // Predicated region
  $region14: #{vanilla_stellar_encoder.3} parent=0 // pred_check
    _
  $region15: #{vanilla_stellar_encoder.3} parent=0 // pred_check_branch
    %18 = sbr.rel (0) target = $region17
  $region16: #{vanilla_stellar_encoder.3} parent=0 // pred_region
    _
  $region17: #{vanilla_stellar_encoder.3} parent=0 // pred_fallthru
    _
  // Predicated region
  $region18: #{vanilla_stellar_encoder.3} parent=0 // pred_check
    _
  $region19: #{vanilla_stellar_encoder.3} parent=0 // pred_check_branch
    %20 = sbr.rel (0) target = $region21
  $region20: #{vanilla_stellar_encoder.3} parent=0 // pred_region
    _
  $region21: #{vanilla_stellar_encoder.3} parent=0 // pred_fallthru
    _
  // Predicated region
  $region22: #{vanilla_stellar_encoder.3} parent=0 // pred_check
    _
  $region23: #{vanilla_stellar_encoder.3} parent=0 // pred_check_branch
    %22 = sbr.rel (0) target = $region25
  $region24: #{vanilla_stellar_encoder.3} parent=0 // pred_region
    _
  $region25: #{vanilla_stellar_encoder.3} parent=0 // pred_fallthru
    _
  %p24 = scmp.eq.s32.totalorder 0, 0
  // Predicated region
  $region26: #{vanilla_stellar_encoder.3} parent=0 // pred_check
    %p25 = pneg %p24
  $region27: #{vanilla_stellar_encoder.3} parent=0 // pred_check_branch
    %27 = sbr.rel (%p25) target = $region29
  $region28: #{vanilla_stellar_encoder.3} parent=0 // pred_region
    %28 = vst [vmem:[#allocation2] sm:$0xff] 0.0
    %29 = vst [vmem:[#allocation2 + $0x8] sm:$0xff] 0.0
    %30 = vst [vmem:[#allocation2 + $0x10] sm:$0xff] 0.0
    %31 = vst [vmem:[#allocation2 + $0x18] sm:$0xff] 0.0
    %32 = vst [vmem:[#allocation2 + $0x20] sm:$0xff] 0.0
    %33 = vst [vmem:[#allocation2 + $0x28] sm:$0xff] 0.0
    %34 = vst [vmem:[#allocation2 + $0x30] sm:$0xff] 0.0
    %35 = vst [vmem:[#allocation2 + $0x38] sm:$0xff] 0.0
    %36 = vst [vmem:[#allocation2 + $0x40] sm:$0xff] 0.0
    %37 = vst [vmem:[#allocation2 + $0x48] sm:$0xff] 0.0
    %38 = vst [vmem:[#allocation2 + $0x50] sm:$0xff] 0.0
    %39 = vst [vmem:[#allocation2 + $0x58] sm:$0xff] 0.0
    %40 = vst [vmem:[#allocation2 + $0x60] sm:$0xff] 0.0
    %41 = vst [vmem:[#allocation2 + $0x68] sm:$0xff] 0.0
    %42 = vst [vmem:[#allocation2 + $0x70] sm:$0xff] 0.0
    %43 = vst [vmem:[#allocation2 + $0x78] sm:$0xff] 0.0
  $region29: #{vanilla_stellar_encoder.3} parent=0 // pred_fallthru
    _
  %s44 = smul.u32 0, 128
  %s45 = sshra.s32 %s44, 3
  %s46 = sand.u32 %s44, 7
  %s47 = smul.addr %s45, 4
  %s48 = scalar_lea.vmem %s1, %s47
  %v49 = vld [vmem:[%s48] sm:$0xf]
  %v50 = vld [vmem:[%s48 + $0x4] sm:$0xf]
  %v51 = vld [vmem:[%s48 + $0x8] sm:$0xf]
  %v52 = vld [vmem:[%s48 + $0xc] sm:$0xf]
  %v53 = vld [vmem:[%s48 + $0x10] sm:$0xf]
  %v54 = vld [vmem:[%s48 + $0x14] sm:$0xf]
  %v55 = vld [vmem:[%s48 + $0x18] sm:$0xf]
  %v56 = vld [vmem:[%s48 + $0x1c] sm:$0xf]
  %v57 = vld [vmem:[%s48 + $0x20] sm:$0xf]
  %v58 = vld [vmem:[%s48 + $0x24] sm:$0xf]
  %v59 = vld [vmem:[%s48 + $0x28] sm:$0xf]
  %v60 = vld [vmem:[%s48 + $0x2c] sm:$0xf]
  %v61 = vld [vmem:[%s48 + $0x30] sm:$0xf]
  %v62 = vld [vmem:[%s48 + $0x34] sm:$0xf]
  %v63 = vld [vmem:[%s48 + $0x38] sm:$0xf]
  %v64 = vld [vmem:[%s48 + $0x3c] sm:$0xf]
  %v65 = vld [vmem:[#allocation2] sm:$0xff]
  %v66 = vld [vmem:[#allocation2 + $0x8] sm:$0xff]
  %v67 = vld [vmem:[#allocation2 + $0x10] sm:$0xff]
  %v68 = vld [vmem:[#allocation2 + $0x18] sm:$0xff]
  %v69 = vld [vmem:[#allocation2 + $0x20] sm:$0xff]
  %v70 = vld [vmem:[#allocation2 + $0x28] sm:$0xff]
  %v71 = vld [vmem:[#allocation2 + $0x30] sm:$0xff]
  %v72 = vld [vmem:[#allocation2 + $0x38] sm:$0xff]
  %v73 = vld [vmem:[#allocation2 + $0x40] sm:$0xff]
  %v74 = vld [vmem:[#allocation2 + $0x48] sm:$0xff]
  %v75 = vld [vmem:[#allocation2 + $0x50] sm:$0xff]
  %v76 = vld [vmem:[#allocation2 + $0x58] sm:$0xff]
  %v77 = vld [vmem:[#allocation2 + $0x60] sm:$0xff]
  %v78 = vld [vmem:[#allocation2 + $0x68] sm:$0xff]
  %v79 = vld [vmem:[#allocation2 + $0x70] sm:$0xff]
  %v80 = vld [vmem:[#allocation2 + $0x78] sm:$0xff]
  %v81 = vld [vmem:[%s0] sm:$0xf]
  %v82 = vld [vmem:[%s0 + $0x4] sm:$0xf]
  %v83 = vld [vmem:[%s0 + $0x8] sm:$0xf]
  %v84 = vld [vmem:[%s0 + $0xc] sm:$0xf]
  %v85 = vld [vmem:[%s0 + $0x10] sm:$0xf]
  %v86 = vld [vmem:[%s0 + $0x14] sm:$0xf]
  %v87 = vld [vmem:[%s0 + $0x18] sm:$0xf]
  %v88 = vld [vmem:[%s0 + $0x1c] sm:$0xf]
  %v89 = vld [vmem:[%s0 + $0x20] sm:$0xf]
  %v90 = vld [vmem:[%s0 + $0x24] sm:$0xf]
  %v91 = vld [vmem:[%s0 + $0x28] sm:$0xf]
  %v92 = vld [vmem:[%s0 + $0x2c] sm:$0xf]
  %v93 = vld [vmem:[%s0 + $0x30] sm:$0xf]
  %v94 = vld [vmem:[%s0 + $0x34] sm:$0xf]
  %v95 = vld [vmem:[%s0 + $0x38] sm:$0xf]
  %v96 = vld [vmem:[%s0 + $0x3c] sm:$0xf]
  %v113 = vunpack.c.l.b16 %v81
  %v114 = vunpack.c.l.b16 %v82
  %v115 = vunpack.c.l.b16 %v83
  %v116 = vunpack.c.l.b16 %v84
  %v117 = vunpack.c.l.b16 %v85
  %v118 = vunpack.c.l.b16 %v86
  %v119 = vunpack.c.l.b16 %v87
  %v120 = vunpack.c.l.b16 %v88
  %v121 = vunpack.c.l.b16 %v89
  %v122 = vunpack.c.l.b16 %v90
  %v123 = vunpack.c.l.b16 %v91
  %v124 = vunpack.c.l.b16 %v92
  %v125 = vunpack.c.l.b16 %v93
  %v126 = vunpack.c.l.b16 %v94
  %v127 = vunpack.c.l.b16 %v95
  %v128 = vunpack.c.l.b16 %v96
  %v129 = vpack.c.b16 %v114, %v113
  %v130 = vpack.c.b16 %v116, %v115
  %v131 = vpack.c.b16 %v118, %v117
  %v132 = vpack.c.b16 %v120, %v119
  %v133 = vpack.c.b16 %v122, %v121
  %v134 = vpack.c.b16 %v124, %v123
  %v135 = vpack.c.b16 %v126, %v125
  %v136 = vpack.c.b16 %v128, %v127
  %v161 = vunpack.c.l.b16 %v49
  %v162 = vunpack.c.l.b16 %v50
  %v163 = vunpack.c.l.b16 %v51
  %v164 = vunpack.c.l.b16 %v52
  %v165 = vunpack.c.l.b16 %v53
  %v166 = vunpack.c.l.b16 %v54
  %v167 = vunpack.c.l.b16 %v55
  %v168 = vunpack.c.l.b16 %v56
  %v169 = vunpack.c.l.b16 %v57
  %v170 = vunpack.c.l.b16 %v58
  %v171 = vunpack.c.l.b16 %v59
  %v172 = vunpack.c.l.b16 %v60
  %v173 = vunpack.c.l.b16 %v61
  %v174 = vunpack.c.l.b16 %v62
  %v175 = vunpack.c.l.b16 %v63
  %v176 = vunpack.c.l.b16 %v64
  %v177 = vpack.c.b16 %v162, %v161
  %v178 = vpack.c.b16 %v164, %v163
  %v179 = vpack.c.b16 %v166, %v165
  %v180 = vpack.c.b16 %v168, %v167
  %v181 = vpack.c.b16 %v170, %v169
  %v182 = vpack.c.b16 %v172, %v171
  %v183 = vpack.c.b16 %v174, %v173
  %v184 = vpack.c.b16 %v176, %v175
  %193 = vmatprep.subr.bf16.mxu0 0
  %194 = vmatpush1.bf16.msra.mxu0 %v177
  %195 = vmatprep.subr.bf16.mxu0 0
  %196 = vmatpush1.bf16.msra.mxu0 %v178
  %197 = vmatprep.subr.bf16.mxu0 0
  %198 = vmatpush1.bf16.msra.mxu0 %v179
  %199 = vmatprep.subr.bf16.mxu0 0
  %200 = vmatpush1.bf16.msra.mxu0 %v180
  %201 = vmatprep.subr.bf16.mxu0 0
  %202 = vmatpush1.bf16.msra.mxu0 %v181
  %203 = vmatprep.subr.bf16.mxu0 0
  %204 = vmatpush1.bf16.msra.mxu0 %v182
  %205 = vmatprep.subr.bf16.mxu0 0
  %206 = vmatpush1.bf16.msra.mxu0 %v183
  %207 = vmatprep.subr.bf16.mxu0 0
  %208 = vmatpush1.bf16.msra.mxu0 %v184
  %209 = vmatprep.subr.bf16.mxu0 0
  %210 = vmatpush1.bf16.msra.mxu0 0
  %211 = vmatprep.subr.bf16.mxu0 0
  %212 = vmatpush1.bf16.msra.mxu0 0
  %213 = vmatprep.subr.bf16.mxu0 0
  %214 = vmatpush1.bf16.msra.mxu0 0
  %215 = vmatprep.subr.bf16.mxu0 0
  %216 = vmatpush1.bf16.msra.mxu0 0
  %217 = vmatprep.subr.bf16.mxu0 0
  %218 = vmatpush1.bf16.msra.mxu0 0
  %219 = vmatprep.subr.bf16.mxu0 0
  %220 = vmatpush1.bf16.msra.mxu0 0
  %221 = vmatprep.subr.bf16.mxu0 0
  %222 = vmatpush1.bf16.msra.mxu0 0
  %223 = vmatprep.subr.bf16.mxu0 0
  %224 = vmatpush1.bf16.msra.mxu0 0
  %225 = vmatprep.mubr.bf16.mxu0 0
  %226 = vmatmul.mubr.bf16.gmra.mrb[0].mxu0 %v129
  %v227 = vpop.f32.mrb[0].mxu0
  %v228 = vadd.f32 0.0, %v227
  %v229 = vpop.f32.mrb[0].mxu0
  %v230 = vpop.f32.mrb[0].mxu0
  %v231 = vadd.f32 0.0, %v230
  %v232 = vpop.f32.mrb[0].mxu0
  %233 = vmatprep.mubr.bf16.mxu0 0
  %234 = vmatmul.mubr.bf16.gmra.mrb[0].mxu0 %v130
  %v235 = vpop.f32.mrb[0].mxu0
  %v236 = vadd.f32 0.0, %v235
  %v237 = vpop.f32.mrb[0].mxu0
  %v238 = vpop.f32.mrb[0].mxu0
  %v239 = vadd.f32 0.0, %v238
  %v240 = vpop.f32.mrb[0].mxu0
  %241 = vmatprep.mubr.bf16.mxu0 0
  %242 = vmatmul.mubr.bf16.gmra.mrb[0].mxu0 %v131
  %v243 = vpop.f32.mrb[0].mxu0
  %v244 = vadd.f32 0.0, %v243
  %v245 = vpop.f32.mrb[0].mxu0
  %v246 = vpop.f32.mrb[0].mxu0
  %v247 = vadd.f32 0.0, %v246
  %v248 = vpop.f32.mrb[0].mxu0
  %249 = vmatprep.mubr.bf16.mxu0 0
  %250 = vmatmul.mubr.bf16.gmra.mrb[0].mxu0 %v132
  %v251 = vpop.f32.mrb[0].mxu0
  %v252 = vadd.f32 0.0, %v251
  %v253 = vpop.f32.mrb[0].mxu0
  %v254 = vpop.f32.mrb[0].mxu0
  %v255 = vadd.f32 0.0, %v254
  %v256 = vpop.f32.mrb[0].mxu0
  %257 = vmatprep.mubr.bf16.mxu0 0
  %258 = vmatmul.mubr.bf16.gmra.mrb[0].mxu0 %v133
  %v259 = vpop.f32.mrb[0].mxu0
  %v260 = vadd.f32 0.0, %v259
  %v261 = vpop.f32.mrb[0].mxu0
  %v262 = vpop.f32.mrb[0].mxu0
  %v263 = vadd.f32 0.0, %v262
  %v264 = vpop.f32.mrb[0].mxu0
  %265 = vmatprep.mubr.bf16.mxu0 0
  %266 = vmatmul.mubr.bf16.gmra.mrb[0].mxu0 %v134
  %v267 = vpop.f32.mrb[0].mxu0
  %v268 = vadd.f32 0.0, %v267
  %v269 = vpop.f32.mrb[0].mxu0
  %v270 = vpop.f32.mrb[0].mxu0
  %v271 = vadd.f32 0.0, %v270
  %v272 = vpop.f32.mrb[0].mxu0
  %273 = vmatprep.mubr.bf16.mxu0 0
  %274 = vmatmul.mubr.bf16.gmra.mrb[0].mxu0 %v135
  %v275 = vpop.f32.mrb[0].mxu0
  %v276 = vadd.f32 0.0, %v275
  %v277 = vpop.f32.mrb[0].mxu0
  %v278 = vpop.f32.mrb[0].mxu0
  %v279 = vadd.f32 0.0, %v278
  %v280 = vpop.f32.mrb[0].mxu0
  %281 = vmatprep.mubr.bf16.mxu0 0
  %282 = vmatmul.mubr.bf16.gmra.mrb[0].mxu0 %v136
  %v283 = vpop.f32.mrb[0].mxu0
  %v284 = vadd.f32 0.0, %v283
  %v285 = vpop.f32.mrb[0].mxu0
  %v286 = vpop.f32.mrb[0].mxu0
  %v287 = vadd.f32 0.0, %v286
  %v288 = vpop.f32.mrb[0].mxu0
  %289 = vdwg.mxu0
  %v290 = vadd.f32 %v65, %v228
  %v291 = vadd.f32 %v66, %v231
  %v292 = vadd.f32 %v67, %v236
  %v293 = vadd.f32 %v68, %v239
  %v294 = vadd.f32 %v69, %v244
  %v295 = vadd.f32 %v70, %v247
  %v296 = vadd.f32 %v71, %v252
  %v297 = vadd.f32 %v72, %v255
  %v298 = vadd.f32 %v73, %v260
  %v299 = vadd.f32 %v74, %v263
  %v300 = vadd.f32 %v75, %v268
  %v301 = vadd.f32 %v76, %v271
  %v302 = vadd.f32 %v77, %v276
  %v303 = vadd.f32 %v78, %v279
  %v304 = vadd.f32 %v79, %v284
  %v305 = vadd.f32 %v80, %v287
  %306 = vst [vmem:[#allocation2] sm:$0xff] %v290
  %307 = vst [vmem:[#allocation2 + $0x8] sm:$0xff] %v291
  %308 = vst [vmem:[#allocation2 + $0x10] sm:$0xff] %v292
  %309 = vst [vmem:[#allocation2 + $0x18] sm:$0xff] %v293
  %310 = vst [vmem:[#allocation2 + $0x20] sm:$0xff] %v294
  %311 = vst [vmem:[#allocation2 + $0x28] sm:$0xff] %v295
  %312 = vst [vmem:[#allocation2 + $0x30] sm:$0xff] %v296
  %313 = vst [vmem:[#allocation2 + $0x38] sm:$0xff] %v297
  %314 = vst [vmem:[#allocation2 + $0x40] sm:$0xff] %v298
  %315 = vst [vmem:[#allocation2 + $0x48] sm:$0xff] %v299
  %316 = vst [vmem:[#allocation2 + $0x50] sm:$0xff] %v300
  %317 = vst [vmem:[#allocation2 + $0x58] sm:$0xff] %v301
  %318 = vst [vmem:[#allocation2 + $0x60] sm:$0xff] %v302
  %319 = vst [vmem:[#allocation2 + $0x68] sm:$0xff] %v303
  %320 = vst [vmem:[#allocation2 + $0x70] sm:$0xff] %v304
  %321 = vst [vmem:[#allocation2 + $0x78] sm:$0xff] %v305
  // Predicated region
  $region30: #{vanilla_stellar_encoder.3} parent=0 // pred_check
    %p322 = pneg %p24
  $region31: #{vanilla_stellar_encoder.3} parent=0 // pred_check_branch
    %324 = sbr.rel (%p322) target = $region33
  $region32: #{vanilla_stellar_encoder.3} parent=0 // pred_region
    %v325 = vld [vmem:[#allocation2] sm:$0xff]
    %v326 = vld [vmem:[#allocation2 + $0x8] sm:$0xff]
    %v327 = vld [vmem:[#allocation2 + $0x10] sm:$0xff]
    %v328 = vld [vmem:[#allocation2 + $0x18] sm:$0xff]
    %v329 = vld [vmem:[#allocation2 + $0x20] sm:$0xff]
    %v330 = vld [vmem:[#allocation2 + $0x28] sm:$0xff]
    %v331 = vld [vmem:[#allocation2 + $0x30] sm:$0xff]
    %v332 = vld [vmem:[#allocation2 + $0x38] sm:$0xff]
    %v333 = vld [vmem:[#allocation2 + $0x40] sm:$0xff]
    %v334 = vld [vmem:[#allocation2 + $0x48] sm:$0xff]
    %v335 = vld [vmem:[#allocation2 + $0x50] sm:$0xff]
    %v336 = vld [vmem:[#allocation2 + $0x58] sm:$0xff]
    %v337 = vld [vmem:[#allocation2 + $0x60] sm:$0xff]
    %v338 = vld [vmem:[#allocation2 + $0x68] sm:$0xff]
    %v339 = vld [vmem:[#allocation2 + $0x70] sm:$0xff]
    %v340 = vld [vmem:[#allocation2 + $0x78] sm:$0xff]
    %v341 = vld [vmem:[%s2] sm:$0xff]
    %v342 = vld [vmem:[%s2 + $0x8] sm:$0xff]
    %v343 = vld [vmem:[%s2 + $0x10] sm:$0xff]
    %v344 = vld [vmem:[%s2 + $0x18] sm:$0xff]
    %v345 = vld [vmem:[%s2 + $0x20] sm:$0xff]
    %v346 = vld [vmem:[%s2 + $0x28] sm:$0xff]
    %v347 = vld [vmem:[%s2 + $0x30] sm:$0xff]
    %v348 = vld [vmem:[%s2 + $0x38] sm:$0xff]
    %v349 = vld [vmem:[%s2 + $0x40] sm:$0xff]
    %v350 = vld [vmem:[%s2 + $0x48] sm:$0xff]
    %v351 = vld [vmem:[%s2 + $0x50] sm:$0xff]
    %v352 = vld [vmem:[%s2 + $0x58] sm:$0xff]
    %v353 = vld [vmem:[%s2 + $0x60] sm:$0xff]
    %v354 = vld [vmem:[%s2 + $0x68] sm:$0xff]
    %v355 = vld [vmem:[%s2 + $0x70] sm:$0xff]
    %v356 = vld [vmem:[%s2 + $0x78] sm:$0xff]
    %v357 = vmul.f32 %v325, %v341
    %v358 = vmul.f32 %v326, %v342
    %v359 = vmul.f32 %v327, %v343
    %v360 = vmul.f32 %v328, %v344
    %v361 = vmul.f32 %v329, %v345
    %v362 = vmul.f32 %v330, %v346
    %v363 = vmul.f32 %v331, %v347
    %v364 = vmul.f32 %v332, %v348
    %v365 = vmul.f32 %v333, %v349
    %v366 = vmul.f32 %v334, %v350
    %v367 = vmul.f32 %v335, %v351
    %v368 = vmul.f32 %v336, %v352
    %v369 = vmul.f32 %v337, %v353
    %v370 = vmul.f32 %v338, %v354
    %v371 = vmul.f32 %v339, %v355
    %v372 = vmul.f32 %v340, %v356
    %v373 = vpack.c.bf16 %v358, %v357
    %v374 = vpack.c.bf16 %v360, %v359
    %v375 = vpack.c.bf16 %v362, %v361
    %v376 = vpack.c.bf16 %v364, %v363
    %v377 = vpack.c.bf16 %v366, %v365
    %v378 = vpack.c.bf16 %v368, %v367
    %v379 = vpack.c.bf16 %v370, %v369
    %v380 = vpack.c.bf16 %v372, %v371
    %s381 = smul.u32 0, 128
    %s382 = sshra.s32 %s381, 3
    %s383 = sand.u32 %s381, 7
    %s384 = smul.addr %s382, 4
    %s385 = scalar_lea.vmem %s1, %s384
    %v386 = vld [vmem:[%s385] sm:$0xf]
    %v387 = vld [vmem:[%s385 + $0x4] sm:$0xf]
    %v388 = vld [vmem:[%s385 + $0x8] sm:$0xf]
    %v389 = vld [vmem:[%s385 + $0xc] sm:$0xf]
    %v390 = vld [vmem:[%s385 + $0x10] sm:$0xf]
    %v391 = vld [vmem:[%s385 + $0x14] sm:$0xf]
    %v392 = vld [vmem:[%s385 + $0x18] sm:$0xf]
    %v393 = vld [vmem:[%s385 + $0x1c] sm:$0xf]
    %v394 = vld [vmem:[%s385 + $0x20] sm:$0xf]
    %v395 = vld [vmem:[%s385 + $0x24] sm:$0xf]
    %v396 = vld [vmem:[%s385 + $0x28] sm:$0xf]
    %v397 = vld [vmem:[%s385 + $0x2c] sm:$0xf]
    %v398 = vld [vmem:[%s385 + $0x30] sm:$0xf]
    %v399 = vld [vmem:[%s385 + $0x34] sm:$0xf]
    %v400 = vld [vmem:[%s385 + $0x38] sm:$0xf]
    %v401 = vld [vmem:[%s385 + $0x3c] sm:$0xf]
    %v402 = vld [vmem:[%s3] sm:$0xf]
    %v403 = vld [vmem:[%s3 + $0x4] sm:$0xf]
    %v404 = vld [vmem:[%s3 + $0x8] sm:$0xf]
    %v405 = vld [vmem:[%s3 + $0xc] sm:$0xf]
    %v406 = vld [vmem:[%s3 + $0x10] sm:$0xf]
    %v407 = vld [vmem:[%s3 + $0x14] sm:$0xf]
    %v408 = vld [vmem:[%s3 + $0x18] sm:$0xf]
    %v409 = vld [vmem:[%s3 + $0x1c] sm:$0xf]
    %v410 = vld [vmem:[%s3 + $0x20] sm:$0xf]
    %v411 = vld [vmem:[%s3 + $0x24] sm:$0xf]
    %v412 = vld [vmem:[%s3 + $0x28] sm:$0xf]
    %v413 = vld [vmem:[%s3 + $0x2c] sm:$0xf]
    %v414 = vld [vmem:[%s3 + $0x30] sm:$0xf]
    %v415 = vld [vmem:[%s3 + $0x34] sm:$0xf]
    %v416 = vld [vmem:[%s3 + $0x38] sm:$0xf]
    %v417 = vld [vmem:[%s3 + $0x3c] sm:$0xf]
    %v418 = vld [vmem:[%s4] sm:$0xf]
    %v419 = vld [vmem:[%s4 + $0x4] sm:$0xf]
    %v420 = vld [vmem:[%s4 + $0x8] sm:$0xf]
    %v421 = vld [vmem:[%s4 + $0xc] sm:$0xf]
    %v422 = vld [vmem:[%s4 + $0x10] sm:$0xf]
    %v423 = vld [vmem:[%s4 + $0x14] sm:$0xf]
    %v424 = vld [vmem:[%s4 + $0x18] sm:$0xf]
    %v425 = vld [vmem:[%s4 + $0x1c] sm:$0xf]
    %v426 = vld [vmem:[%s4 + $0x20] sm:$0xf]
    %v427 = vld [vmem:[%s4 + $0x24] sm:$0xf]
    %v428 = vld [vmem:[%s4 + $0x28] sm:$0xf]
    %v429 = vld [vmem:[%s4 + $0x2c] sm:$0xf]
    %v430 = vld [vmem:[%s4 + $0x30] sm:$0xf]
    %v431 = vld [vmem:[%s4 + $0x34] sm:$0xf]
    %v432 = vld [vmem:[%s4 + $0x38] sm:$0xf]
    %v433 = vld [vmem:[%s4 + $0x3c] sm:$0xf]
    %v450 = vunpack.c.l.b16 %v386
    %v451 = vunpack.c.l.b16 %v387
    %v452 = vunpack.c.l.b16 %v388
    %v453 = vunpack.c.l.b16 %v389
    %v454 = vunpack.c.l.b16 %v390
    %v455 = vunpack.c.l.b16 %v391
    %v456 = vunpack.c.l.b16 %v392
    %v457 = vunpack.c.l.b16 %v393
    %v458 = vunpack.c.l.b16 %v394
    %v459 = vunpack.c.l.b16 %v395
    %v460 = vunpack.c.l.b16 %v396
    %v461 = vunpack.c.l.b16 %v397
    %v462 = vunpack.c.l.b16 %v398
    %v463 = vunpack.c.l.b16 %v399
    %v464 = vunpack.c.l.b16 %v400
    %v465 = vunpack.c.l.b16 %v401
    %v466 = vpack.c.b16 %v451, %v450
    %v467 = vpack.c.b16 %v453, %v452
    %v468 = vpack.c.b16 %v455, %v454
    %v469 = vpack.c.b16 %v457, %v456
    %v470 = vpack.c.b16 %v459, %v458
    %v471 = vpack.c.b16 %v461, %v460
    %v472 = vpack.c.b16 %v463, %v462
    %v473 = vpack.c.b16 %v465, %v464
    %v498 = vunpack.c.l.b16 %v418
    %v499 = vunpack.c.l.b16 %v419
    %v500 = vunpack.c.l.b16 %v420
    %v501 = vunpack.c.l.b16 %v421
    %v502 = vunpack.c.l.b16 %v422
    %v503 = vunpack.c.l.b16 %v423
    %v504 = vunpack.c.l.b16 %v424
    %v505 = vunpack.c.l.b16 %v425
    %v506 = vunpack.c.l.b16 %v426
    %v507 = vunpack.c.l.b16 %v427
    %v508 = vunpack.c.l.b16 %v428
    %v509 = vunpack.c.l.b16 %v429
    %v510 = vunpack.c.l.b16 %v430
    %v511 = vunpack.c.l.b16 %v431
    %v512 = vunpack.c.l.b16 %v432
    %v513 = vunpack.c.l.b16 %v433
    %v514 = vpack.c.b16 %v499, %v498
    %v515 = vpack.c.b16 %v501, %v500
    %v516 = vpack.c.b16 %v503, %v502
    %v517 = vpack.c.b16 %v505, %v504
    %v518 = vpack.c.b16 %v507, %v506
    %v519 = vpack.c.b16 %v509, %v508
    %v520 = vpack.c.b16 %v511, %v510
    %v521 = vpack.c.b16 %v513, %v512
    %530 = vmatprep.subr.bf16.mxu0 0
    %531 = vmatpush1.bf16.msra.mxu0 %v514
    %532 = vmatprep.subr.bf16.mxu0 0
    %533 = vmatpush1.bf16.msra.mxu0 %v515
    %534 = vmatprep.subr.bf16.mxu0 0
    %535 = vmatpush1.bf16.msra.mxu0 %v516
    %536 = vmatprep.subr.bf16.mxu0 0
    %537 = vmatpush1.bf16.msra.mxu0 %v517
    %538 = vmatprep.subr.bf16.mxu0 0
    %539 = vmatpush1.bf16.msra.mxu0 %v518
    %540 = vmatprep.subr.bf16.mxu0 0
    %541 = vmatpush1.bf16.msra.mxu0 %v519
    %542 = vmatprep.subr.bf16.mxu0 0
    %543 = vmatpush1.bf16.msra.mxu0 %v520
    %544 = vmatprep.subr.bf16.mxu0 0
    %545 = vmatpush1.bf16.msra.mxu0 %v521
    %546 = vmatprep.subr.bf16.mxu0 0
    %547 = vmatpush1.bf16.msra.mxu0 0
    %548 = vmatprep.subr.bf16.mxu0 0
    %549 = vmatpush1.bf16.msra.mxu0 0
    %550 = vmatprep.subr.bf16.mxu0 0
    %551 = vmatpush1.bf16.msra.mxu0 0
    %552 = vmatprep.subr.bf16.mxu0 0
    %553 = vmatpush1.bf16.msra.mxu0 0
    %554 = vmatprep.subr.bf16.mxu0 0
    %555 = vmatpush1.bf16.msra.mxu0 0
    %556 = vmatprep.subr.bf16.mxu0 0
    %557 = vmatpush1.bf16.msra.mxu0 0
    %558 = vmatprep.subr.bf16.mxu0 0
    %559 = vmatpush1.bf16.msra.mxu0 0
    %560 = vmatprep.subr.bf16.mxu0 0
    %561 = vmatpush1.bf16.msra.mxu0 0
    %562 = vmatprep.mubr.bf16.mxu0 0
    %563 = vmatmul.mubr.bf16.gmra.mrb[0].mxu0 %v466
    %v564 = vpop.f32.mrb[0].mxu0
    %v565 = vadd.f32 0.0, %v564
    %v566 = vpop.f32.mrb[0].mxu0
    %v567 = vpop.f32.mrb[0].mxu0
    %v568 = vadd.f32 0.0, %v567
    %v569 = vpop.f32.mrb[0].mxu0
    %570 = vmatprep.mubr.bf16.mxu0 0
    %571 = vmatmul.mubr.bf16.gmra.mrb[0].mxu0 %v467
    %v572 = vpop.f32.mrb[0].mxu0
    %v573 = vadd.f32 0.0, %v572
    %v574 = vpop.f32.mrb[0].mxu0
    %v575 = vpop.f32.mrb[0].mxu0
    %v576 = vadd.f32 0.0, %v575
    %v577 = vpop.f32.mrb[0].mxu0
    %578 = vmatprep.mubr.bf16.mxu0 0
    %579 = vmatmul.mubr.bf16.gmra.mrb[0].mxu0 %v468
    %v580 = vpop.f32.mrb[0].mxu0
    %v581 = vadd.f32 0.0, %v580
    %v582 = vpop.f32.mrb[0].mxu0
    %v583 = vpop.f32.mrb[0].mxu0
    %v584 = vadd.f32 0.0, %v583
    %v585 = vpop.f32.mrb[0].mxu0
    %586 = vmatprep.mubr.bf16.mxu0 0
    %587 = vmatmul.mubr.bf16.gmra.mrb[0].mxu0 %v469
    %v588 = vpop.f32.mrb[0].mxu0
    %v589 = vadd.f32 0.0, %v588
    %v590 = vpop.f32.mrb[0].mxu0
    %v591 = vpop.f32.mrb[0].mxu0
    %v592 = vadd.f32 0.0, %v591
    %v593 = vpop.f32.mrb[0].mxu0
    %594 = vmatprep.mubr.bf16.mxu0 0
    %595 = vmatmul.mubr.bf16.gmra.mrb[0].mxu0 %v470
    %v596 = vpop.f32.mrb[0].mxu0
    %v597 = vadd.f32 0.0, %v596
    %v598 = vpop.f32.mrb[0].mxu0
    %v599 = vpop.f32.mrb[0].mxu0
    %v600 = vadd.f32 0.0, %v599
    %v601 = vpop.f32.mrb[0].mxu0
    %602 = vmatprep.mubr.bf16.mxu0 0
    %603 = vmatmul.mubr.bf16.gmra.mrb[0].mxu0 %v471
    %v604 = vpop.f32.mrb[0].mxu0
    %v605 = vadd.f32 0.0, %v604
    %v606 = vpop.f32.mrb[0].mxu0
    %v607 = vpop.f32.mrb[0].mxu0
    %v608 = vadd.f32 0.0, %v607
    %v609 = vpop.f32.mrb[0].mxu0
    %610 = vmatprep.mubr.bf16.mxu0 0
    %611 = vmatmul.mubr.bf16.gmra.mrb[0].mxu0 %v472
    %v612 = vpop.f32.mrb[0].mxu0
    %v613 = vadd.f32 0.0, %v612
    %v614 = vpop.f32.mrb[0].mxu0
    %v615 = vpop.f32.mrb[0].mxu0
    %v616 = vadd.f32 0.0, %v615
    %v617 = vpop.f32.mrb[0].mxu0
    %618 = vmatprep.mubr.bf16.mxu0 0
    %619 = vmatmul.mubr.bf16.gmra.mrb[0].mxu0 %v473
    %v620 = vpop.f32.mrb[0].mxu0
    %v621 = vadd.f32 0.0, %v620
    %v622 = vpop.f32.mrb[0].mxu0
    %v623 = vpop.f32.mrb[0].mxu0
    %v624 = vadd.f32 0.0, %v623
    %v625 = vpop.f32.mrb[0].mxu0
    %626 = vdwg.mxu0
    %v643 = vunpack.c.l.b16 %v402
    %v644 = vunpack.c.l.b16 %v403
    %v645 = vunpack.c.l.b16 %v404
    %v646 = vunpack.c.l.b16 %v405
    %v647 = vunpack.c.l.b16 %v406
    %v648 = vunpack.c.l.b16 %v407
    %v649 = vunpack.c.l.b16 %v408
    %v650 = vunpack.c.l.b16 %v409
    %v651 = vunpack.c.l.b16 %v410
    %v652 = vunpack.c.l.b16 %v411
    %v653 = vunpack.c.l.b16 %v412
    %v654 = vunpack.c.l.b16 %v413
    %v655 = vunpack.c.l.b16 %v414
    %v656 = vunpack.c.l.b16 %v415
    %v657 = vunpack.c.l.b16 %v416
    %v658 = vunpack.c.l.b16 %v417
    %v659 = vpack.c.b16 %v644, %v643
    %v660 = vpack.c.b16 %v646, %v645
    %v661 = vpack.c.b16 %v648, %v647
    %v662 = vpack.c.b16 %v650, %v649
    %v663 = vpack.c.b16 %v652, %v651
    %v664 = vpack.c.b16 %v654, %v653
    %v665 = vpack.c.b16 %v656, %v655
    %v666 = vpack.c.b16 %v658, %v657
    %675 = vmatprep.subr.bf16.mxu0 0
    %676 = vmatpush1.bf16.msra.mxu0 %v659
    %677 = vmatprep.subr.bf16.mxu0 0
    %678 = vmatpush1.bf16.msra.mxu0 %v660
    %679 = vmatprep.subr.bf16.mxu0 0
    %680 = vmatpush1.bf16.msra.mxu0 %v661
    %681 = vmatprep.subr.bf16.mxu0 0
    %682 = vmatpush1.bf16.msra.mxu0 %v662
    %683 = vmatprep.subr.bf16.mxu0 0
    %684 = vmatpush1.bf16.msra.mxu0 %v663
    %685 = vmatprep.subr.bf16.mxu0 0
    %686 = vmatpush1.bf16.msra.mxu0 %v664
    %687 = vmatprep.subr.bf16.mxu0 0
    %688 = vmatpush1.bf16.msra.mxu0 %v665
    %689 = vmatprep.subr.bf16.mxu0 0
    %690 = vmatpush1.bf16.msra.mxu0 %v666
    %691 = vmatprep.subr.bf16.mxu0 0
    %692 = vmatpush1.bf16.msra.mxu0 0
    %693 = vmatprep.subr.bf16.mxu0 0
    %694 = vmatpush1.bf16.msra.mxu0 0
    %695 = vmatprep.subr.bf16.mxu0 0
    %696 = vmatpush1.bf16.msra.mxu0 0
    %697 = vmatprep.subr.bf16.mxu0 0
    %698 = vmatpush1.bf16.msra.mxu0 0
    %699 = vmatprep.subr.bf16.mxu0 0
    %700 = vmatpush1.bf16.msra.mxu0 0
    %701 = vmatprep.subr.bf16.mxu0 0
    %702 = vmatpush1.bf16.msra.mxu0 0
    %703 = vmatprep.subr.bf16.mxu0 0
    %704 = vmatpush1.bf16.msra.mxu0 0
    %705 = vmatprep.subr.bf16.mxu0 0
    %706 = vmatpush1.bf16.msra.mxu0 0
    %707 = vmatprep.mubr.bf16.mxu0 0
    %708 = vmatmul.mubr.bf16.gmra.mrb[0].mxu0 %v373
    %v709 = vpop.f32.mrb[0].mxu0
    %v710 = vadd.f32 %v565, %v709
    %v711 = vpop.f32.mrb[0].mxu0
    %v712 = vpop.f32.mrb[0].mxu0
    %v713 = vadd.f32 %v568, %v712
    %v714 = vpop.f32.mrb[0].mxu0
    %715 = vmatprep.mubr.bf16.mxu0 0
    %716 = vmatmul.mubr.bf16.gmra.mrb[0].mxu0 %v374
    %v717 = vpop.f32.mrb[0].mxu0
    %v718 = vadd.f32 %v573, %v717
    %v719 = vpop.f32.mrb[0].mxu0
    %v720 = vpop.f32.mrb[0].mxu0
    %v721 = vadd.f32 %v576, %v720
    %v722 = vpop.f32.mrb[0].mxu0
    %723 = vmatprep.mubr.bf16.mxu0 0
    %724 = vmatmul.mubr.bf16.gmra.mrb[0].mxu0 %v375
    %v725 = vpop.f32.mrb[0].mxu0
    %v726 = vadd.f32 %v581, %v725
    %v727 = vpop.f32.mrb[0].mxu0
    %v728 = vpop.f32.mrb[0].mxu0
    %v729 = vadd.f32 %v584, %v728
    %v730 = vpop.f32.mrb[0].mxu0
    %731 = vmatprep.mubr.bf16.mxu0 0
    %732 = vmatmul.mubr.bf16.gmra.mrb[0].mxu0 %v376
    %v733 = vpop.f32.mrb[0].mxu0
    %v734 = vadd.f32 %v589, %v733
    %v735 = vpop.f32.mrb[0].mxu0
    %v736 = vpop.f32.mrb[0].mxu0
    %v737 = vadd.f32 %v592, %v736
    %v738 = vpop.f32.mrb[0].mxu0
    %739 = vmatprep.mubr.bf16.mxu0 0
    %740 = vmatmul.mubr.bf16.gmra.mrb[0].mxu0 %v377
    %v741 = vpop.f32.mrb[0].mxu0
    %v742 = vadd.f32 %v597, %v741
    %v743 = vpop.f32.mrb[0].mxu0
    %v744 = vpop.f32.mrb[0].mxu0
    %v745 = vadd.f32 %v600, %v744
    %v746 = vpop.f32.mrb[0].mxu0
    %747 = vmatprep.mubr.bf16.mxu0 0
    %748 = vmatmul.mubr.bf16.gmra.mrb[0].mxu0 %v378
    %v749 = vpop.f32.mrb[0].mxu0
    %v750 = vadd.f32 %v605, %v749
    %v751 = vpop.f32.mrb[0].mxu0
    %v752 = vpop.f32.mrb[0].mxu0
    %v753 = vadd.f32 %v608, %v752
    %v754 = vpop.f32.mrb[0].mxu0
    %755 = vmatprep.mubr.bf16.mxu0 0
    %756 = vmatmul.mubr.bf16.gmra.mrb[0].mxu0 %v379
    %v757 = vpop.f32.mrb[0].mxu0
    %v758 = vadd.f32 %v613, %v757
    %v759 = vpop.f32.mrb[0].mxu0
    %v760 = vpop.f32.mrb[0].mxu0
    %v761 = vadd.f32 %v616, %v760
    %v762 = vpop.f32.mrb[0].mxu0
    %763 = vmatprep.mubr.bf16.mxu0 0
    %764 = vmatmul.mubr.bf16.gmra.mrb[0].mxu0 %v380
    %v765 = vpop.f32.mrb[0].mxu0
    %v766 = vadd.f32 %v621, %v765
    %v767 = vpop.f32.mrb[0].mxu0
    %v768 = vpop.f32.mrb[0].mxu0
    %v769 = vadd.f32 %v624, %v768
    %v770 = vpop.f32.mrb[0].mxu0
    %771 = vdwg.mxu0
    %v772 = vld [vmem:[%s5] sm:$0x1]
    %v774 = vlaneseq
    %v775 = vshrl.u32 %v774, 7
    %v776 = vsub.s32 0, %v775
    %v777 = vrot.slane %v772, %v776
    %v779 = vadd.f32 %v710, %v777
    %v780 = vadd.f32 %v713, %v777
    %v781 = vadd.f32 %v718, %v777
    %v782 = vadd.f32 %v721, %v777
    %v783 = vadd.f32 %v726, %v777
    %v784 = vadd.f32 %v729, %v777
    %v785 = vadd.f32 %v734, %v777
    %v786 = vadd.f32 %v737, %v777
    %v787 = vadd.f32 %v742, %v777
    %v788 = vadd.f32 %v745, %v777
    %v789 = vadd.f32 %v750, %v777
    %v790 = vadd.f32 %v753, %v777
    %v791 = vadd.f32 %v758, %v777
    %v792 = vadd.f32 %v761, %v777
    %v793 = vadd.f32 %v766, %v777
    %v794 = vadd.f32 %v769, %v777
    %795 = vst [vmem:[%s6] sm:$0xff] %v779
    %796 = vst [vmem:[%s6 + $0x8] sm:$0xff] %v780
    %797 = vst [vmem:[%s6 + $0x10] sm:$0xff] %v781
    %798 = vst [vmem:[%s6 + $0x18] sm:$0xff] %v782
    %799 = vst [vmem:[%s6 + $0x20] sm:$0xff] %v783
    %800 = vst [vmem:[%s6 + $0x28] sm:$0xff] %v784
    %801 = vst [vmem:[%s6 + $0x30] sm:$0xff] %v785
    %802 = vst [vmem:[%s6 + $0x38] sm:$0xff] %v786
    %803 = vst [vmem:[%s6 + $0x40] sm:$0xff] %v787
    %804 = vst [vmem:[%s6 + $0x48] sm:$0xff] %v788
    %805 = vst [vmem:[%s6 + $0x50] sm:$0xff] %v789
    %806 = vst [vmem:[%s6 + $0x58] sm:$0xff] %v790
    %807 = vst [vmem:[%s6 + $0x60] sm:$0xff] %v791
    %808 = vst [vmem:[%s6 + $0x68] sm:$0xff] %v792
    %809 = vst [vmem:[%s6 + $0x70] sm:$0xff] %v793
    %810 = vst [vmem:[%s6 + $0x78] sm:$0xff] %v794
  $region33: #{vanilla_stellar_encoder.3} parent=0 // pred_fallthru
    _
  // Predicated region
  $region34: #{vanilla_stellar_encoder.3} parent=0 // pred_check
    _
  $region35: #{vanilla_stellar_encoder.3} parent=0 // pred_check_branch
    %812 = sbr.rel (0) target = $region37
  $region36: #{vanilla_stellar_encoder.3} parent=0 // pred_region
    _
  $region37: #{vanilla_stellar_encoder.3} parent=0 // pred_fallthru
    _
  // Predicated region
  $region38: #{vanilla_stellar_encoder.3} parent=0 // pred_check
    _
  $region39: #{vanilla_stellar_encoder.3} parent=0 // pred_check_branch
    %814 = sbr.rel (0) target = $region41
  $region40: #{vanilla_stellar_encoder.3} parent=0 // pred_region
    _
  $region41: #{vanilla_stellar_encoder.3} parent=0 // pred_fallthru
    _

</llo_original>
